<compile_context>
chip_gen: v7x
topology: tpu7x:2x2x1
jax: 0.10.0
libtpu: 0.0.40
codegen_flags: <defaults>
</compile_context>

<pallas_src>
import functools

import jax
import jax.numpy as jnp
from jax.experimental import pallas as pl
from jax.experimental.pallas import tpu as pltpu


def _round_up(x, m):
    return ((x + m - 1) // m) * m


def _supports_bf16_vpu():
    """bf16 elementwise is native on v6e/v7x; keep f32 activations elsewhere."""
    try:
        kind = jax.devices()[0].device_kind.lower()
    except Exception:  # pragma: no cover - defensive
        return False
    return ("v6" in kind) or ("v7" in kind)


_ACT_DTYPE = jnp.bfloat16 if _supports_bf16_vpu() else jnp.float32


def _leaky_relu(x, slope=0.2):
    # Valid for 0 < slope < 1: max(x, slope*x) == leaky_relu(x).
    return jnp.maximum(x, x * jnp.asarray(slope, x.dtype))


def _disc_kernel(x_ref, w1_ref, b1_ref, w2_ref, b2_ref, w3_ref, b3_ref, o_ref,
                 *, act_dtype):
    # x_ref: (6, T) f32 tile -- channels on sublanes, pixels on lanes.
    # Cast to bf16 here (instead of a separate XLA pass over HBM).
    x = x_ref[...].astype(jnp.bfloat16)

    # Conv2d(6 -> 64, k=1): (64, 6) @ (6, T) on the MXU.
    h = jnp.dot(w1_ref[...], x, preferred_element_type=act_dtype)
    h = _leaky_relu(h + b1_ref[...])

    # Conv2d(64 -> 128, k=1): (128, 64) @ (64, T).
    h = jnp.dot(w2_ref[...], h.astype(jnp.bfloat16),
                preferred_element_type=act_dtype)
    h = _leaky_relu(h + b2_ref[...])

    # Conv2d(128 -> 1, k=1): (1, 128) @ (128, T) on the (idle) MXU, f32 accum.
    y = jnp.dot(w3_ref[...], h.astype(jnp.bfloat16),
                preferred_element_type=jnp.float32) + b3_ref[...]

    # Sigmoid in f32 with an exact reciprocal (y is only (1, T)); stays in [0,1].
    o_ref[...] = (1.0 / (1.0 + jnp.exp(-y))).astype(o_ref.dtype)


@functools.partial(jax.jit, static_argnames=("tile_p",))
def discriminator_forward(x_nchw, params, tile_p=4096):
    """x_nchw: (N, 6, H, W) float32 -> (N, 1, H, W) float32."""
    w1, b1, w2, b2, w3, b3 = params
    N, C, H, W = x_nchw.shape
    HW = H * W

    act_dtype = _ACT_DTYPE

    # Free reshape (same memory layout) -- no HBM transpose/cast/pad pass.
    x = x_nchw.reshape(N, C, HW)

    # Tiny weights: matmul operands in bf16, biases in the activation dtype.
    w1b = w1.astype(jnp.bfloat16)
    w2b = w2.astype(jnp.bfloat16)
    w3b = w3.astype(jnp.bfloat16)
    b1a = b1.astype(act_dtype)
    b2a = b2.astype(act_dtype)
    b3f = b3.astype(jnp.float32)

    # Pixel tile: big enough to amortize ~0.35us/step grid overhead, clamped
    # for small inputs.  Per-step VMEM at tile=4096 is ~2 MiB.
    tile_hw = max(128, min(tile_p, _round_up(HW, 128)))
    # Keep >=2 grid steps when the batch alone doesn't provide them, so both
    # v7x TensorCores (grid axes are "parallel") get work.
    if N == 1 and HW > 128:
        tile_hw = min(tile_hw, max(128, _round_up(pl.cdiv(HW, 2), 128)))

    grid = (N, pl.cdiv(HW, tile_hw))

    kernel = functools.partial(_disc_kernel, act_dtype=act_dtype)

    # Weights/biases (~40 KiB total) stay whole with constant index maps.
    def full(a):
        return pl.BlockSpec(a.shape, lambda n, i, nd=a.ndim: (0,) * nd)

    out = pl.pallas_call(
        kernel,
        out_shape=jax.ShapeDtypeStruct((N, 1, HW), jnp.float32),
        grid_spec=pltpu.PrefetchScalarGridSpec(
            num_scalar_prefetch=0,
            grid=grid,
            in_specs=[
                # Lane-dense pixel tile straight out of the NCHW tensor.
                pl.BlockSpec((pl.Squeezed(), C, tile_hw), lambda n, i: (n, 0, i)),
                full(w1b), full(b1a),
                full(w2b), full(b2a),
                full(w3b), full(b3f),
            ],
            # Lane-dense (1, tile) output -> unmasked vst on full tiles.
            out_specs=pl.BlockSpec((pl.Squeezed(), 1, tile_hw),
                                   lambda n, i: (n, 0, i)),
        ),
        compiler_params=pltpu.CompilerParams(
            dimension_semantics=("parallel", "parallel")),
    )(x, w1b, b1a, w2b, b2a, w3b, b3f)

    return out.reshape(N, 1, H, W)


def init_params(key, channels_m=64):
    """Deterministic synthetic init matching nn.Conv2d shapes.

    PyTorch Conv2d weight is (out_ch, in_ch, 1, 1); we store the matmul form
    (out_ch, in_ch) and biases as (out_ch, 1) columns so they broadcast over
    the lane (pixel) axis.
    """
    dims = [(6, channels_m), (channels_m, 2 * channels_m), (2 * channels_m, 1)]
    params = []
    for cin, cout in dims:
        key, kw, kb = jax.random.split(key, 3)
        bound = 1.0 / float(cin) ** 0.5  # kaiming-uniform-ish fan-in bound
        w = jax.random.uniform(kw, (cout, cin), jnp.float32, -bound, bound)
        b = jax.random.uniform(kb, (cout, 1), jnp.float32, -bound, bound)
        params.extend([w, b])
    return tuple(params)


def _reference_forward(x_nchw, params):
    """Pure-JAX f32 reference of the module math for a correctness check."""
    w1, b1, w2, b2, w3, b3 = params
    N, C, H, W = x_nchw.shape
    x = x_nchw.reshape(N, C, H * W)
    h = jax.nn.leaky_relu(jnp.einsum("oc,ncp->nop", w1, x) + b1, 0.2)
    h = jax.nn.leaky_relu(jnp.einsum("oc,ncp->nop", w2, h) + b2, 0.2)
    y = jax.nn.sigmoid(jnp.einsum("oc,ncp->nop", w3, h) + b3)
    return y.reshape(N, 1, H, W)


if __name__ == "__main__":
    key = jax.random.PRNGKey(0)
    key, kx = jax.random.split(key)

    # Small shapes consistent with the module: batch=2, in_channels=6, 16x16.
    N, C, H, W = 2, 6, 16, 16
    x = jax.random.normal(kx, (N, C, H, W), jnp.float32)

    params = init_params(key, channels_m=64)

    out = jax.block_until_ready(discriminator_forward(x, params))
    assert out.shape == (N, 1, H, W), out.shape

    ref = _reference_forward(x, params)
    max_err = float(jnp.max(jnp.abs(out - ref)))
    # Tolerance loosened vs. pure-f32 because matmul operands are bf16 and
    # (on v6e/v7x) intermediate activations are kept in bf16.
    assert jnp.allclose(out, ref, atol=2.5e-2, rtol=2.5e-2), max_err

    print("KERNEL_OK")
</pallas_src>

<mosaic_0001>
module attributes {stable_mosaic.version = 11 : i64} {
  func.func @_disc_kernel(%arg0: i32, %arg1: i32, %arg2: memref<1x6x256xf32, #tpu.memory_space<vmem>>, %arg3: memref<64x6xbf16, #tpu.memory_space<vmem>>, %arg4: memref<64x1xf32, #tpu.memory_space<vmem>>, %arg5: memref<128x64xbf16, #tpu.memory_space<vmem>>, %arg6: memref<128x1xf32, #tpu.memory_space<vmem>>, %arg7: memref<1x128xbf16, #tpu.memory_space<vmem>>, %arg8: memref<1x1xf32, #tpu.memory_space<vmem>>, %arg9: memref<1x1x256xf32, #tpu.memory_space<vmem>>) attributes {dimension_semantics = [#tpu.dimension_semantics<parallel>, #tpu.dimension_semantics<parallel>], iteration_bounds = array<i64: 2, 1>, scalar_prefetch = 0 : i64, scratch_operands = 0 : i64, tpu.core_type = #tpu.core_type<tc>, window_params = [{transform_indices = @transform_0, window_bounds = array<i64: 1, 6, 256>}, {pipeline_mode = #tpu.pipeline_mode<synchronous>, transform_indices = @transform_1, window_bounds = array<i64: 64, 6>}, {pipeline_mode = #tpu.pipeline_mode<synchronous>, transform_indices = @transform_2, window_bounds = array<i64: 64, 1>}, {pipeline_mode = #tpu.pipeline_mode<synchronous>, transform_indices = @transform_3, window_bounds = array<i64: 128, 64>}, {pipeline_mode = #tpu.pipeline_mode<synchronous>, transform_indices = @transform_4, window_bounds = array<i64: 128, 1>}, {pipeline_mode = #tpu.pipeline_mode<synchronous>, transform_indices = @transform_5, window_bounds = array<i64: 1, 128>}, {pipeline_mode = #tpu.pipeline_mode<synchronous>, transform_indices = @transform_6, window_bounds = array<i64: 1, 1>}, {transform_indices = @transform_7, window_bounds = array<i64: 1, 1, 256>}]} {
    %c0 = arith.constant 0 : index
    %c0_0 = arith.constant 0 : index
    %c0_1 = arith.constant 0 : index
    %0 = vector.load %arg2[%c0, %c0_0, %c0_1] : memref<1x6x256xf32, #tpu.memory_space<vmem>>, vector<1x6x256xf32>
    %1 = vector.shape_cast %0 : vector<1x6x256xf32> to vector<6x256xf32>
    %2 = arith.truncf %1 : vector<6x256xf32> to vector<6x256xbf16>
    %c0_2 = arith.constant 0 : index
    %c0_3 = arith.constant 0 : index
    %3 = vector.load %arg3[%c0_2, %c0_3] : memref<64x6xbf16, #tpu.memory_space<vmem>>, vector<64x6xbf16>
    %cst = arith.constant dense<0.000000e+00> : vector<64x256xf32>
    %4 = tpu.matmul %3, %2, %cst {dimension_numbers = #tpu.dot_dimension_numbers<[1], [0], [0], [1], [0, 0, 1, 1], [], []>} : vector<64x6xbf16>, vector<6x256xbf16>, vector<64x256xf32> -> vector<64x256xf32>
    %c0_4 = arith.constant 0 : index
    %c0_5 = arith.constant 0 : index
    %5 = vector.load %arg4[%c0_4, %c0_5] : memref<64x1xf32, #tpu.memory_space<vmem>>, vector<64x1xf32>
    %6 = vector.broadcast %5 : vector<64x1xf32> to vector<64x256xf32>
    %7 = arith.addf %4, %6 : vector<64x256xf32>
    %cst_6 = arith.constant 2.000000e-01 : f32
    %8 = vector.broadcast %cst_6 : f32 to vector<64x256xf32>
    %9 = arith.mulf %7, %8 : vector<64x256xf32>
    %10 = arith.maximumf %7, %9 : vector<64x256xf32>
    %c0_7 = arith.constant 0 : index
    %c0_8 = arith.constant 0 : index
    %11 = vector.load %arg5[%c0_7, %c0_8] : memref<128x64xbf16, #tpu.memory_space<vmem>>, vector<128x64xbf16>
    %12 = arith.truncf %10 : vector<64x256xf32> to vector<64x256xbf16>
    %cst_9 = arith.constant dense<0.000000e+00> : vector<128x256xf32>
    %13 = tpu.matmul %11, %12, %cst_9 {dimension_numbers = #tpu.dot_dimension_numbers<[1], [0], [0], [1], [0, 0, 1, 1], [], []>} : vector<128x64xbf16>, vector<64x256xbf16>, vector<128x256xf32> -> vector<128x256xf32>
    %c0_10 = arith.constant 0 : index
    %c0_11 = arith.constant 0 : index
    %14 = vector.load %arg6[%c0_10, %c0_11] : memref<128x1xf32, #tpu.memory_space<vmem>>, vector<128x1xf32>
    %15 = vector.broadcast %14 : vector<128x1xf32> to vector<128x256xf32>
    %16 = arith.addf %13, %15 : vector<128x256xf32>
    %cst_12 = arith.constant 2.000000e-01 : f32
    %17 = vector.broadcast %cst_12 : f32 to vector<128x256xf32>
    %18 = arith.mulf %16, %17 : vector<128x256xf32>
    %19 = arith.maximumf %16, %18 : vector<128x256xf32>
    %c0_13 = arith.constant 0 : index
    %c0_14 = arith.constant 0 : index
    %20 = vector.load %arg7[%c0_13, %c0_14] : memref<1x128xbf16, #tpu.memory_space<vmem>>, vector<1x128xbf16>
    %21 = arith.truncf %19 : vector<128x256xf32> to vector<128x256xbf16>
    %cst_15 = arith.constant dense<0.000000e+00> : vector<1x256xf32>
    %22 = tpu.matmul %20, %21, %cst_15 {dimension_numbers = #tpu.dot_dimension_numbers<[1], [0], [0], [1], [0, 0, 1, 1], [], []>} : vector<1x128xbf16>, vector<128x256xbf16>, vector<1x256xf32> -> vector<1x256xf32>
    %c0_16 = arith.constant 0 : index
    %c0_17 = arith.constant 0 : index
    %23 = vector.load %arg8[%c0_16, %c0_17] : memref<1x1xf32, #tpu.memory_space<vmem>>, vector<1x1xf32>
    %24 = vector.broadcast %23 : vector<1x1xf32> to vector<1x256xf32>
    %25 = arith.addf %22, %24 : vector<1x256xf32>
    %cst_18 = arith.constant 0.000000e+00 : f32
    %26 = vector.broadcast %cst_18 : f32 to vector<1x256xf32>
    %27 = arith.subf %26, %25 : vector<1x256xf32>
    %28 = math.exp %27 : vector<1x256xf32>
    %cst_19 = arith.constant 1.000000e+00 : f32
    %29 = vector.broadcast %cst_19 : f32 to vector<1x256xf32>
    %30 = arith.addf %29, %28 : vector<1x256xf32>
    %cst_20 = arith.constant 1.000000e+00 : f32
    %31 = vector.broadcast %cst_20 : f32 to vector<1x256xf32>
    %32 = arith.divf %31, %30 : vector<1x256xf32>
    %c0_21 = arith.constant 0 : index
    %c0_22 = arith.constant 0 : index
    %c0_23 = arith.constant 0 : index
    %33 = vector.load %arg9[%c0_21, %c0_22, %c0_23] : memref<1x1x256xf32, #tpu.memory_space<vmem>>, vector<1x1x256xf32>
    %34 = vector.shape_cast %33 : vector<1x1x256xf32> to vector<1x256xf32>
    %35 = vector.shape_cast %32 : vector<1x256xf32> to vector<1x1x256xf32>
    tpu.vector_store %arg9[%c0_21, %c0_22, %c0_23], %35 {strides = array<i32>} : memref<1x1x256xf32, #tpu.memory_space<vmem>>, vector<1x1x256xf32>,
    return
  }
  func.func @transform_0(%arg0: i32, %arg1: i32) -> (i32, i32, i32) {
    %c0_i32 = arith.constant 0 : i32
    %c0_i32_0 = arith.constant 0 : i32
    return %arg0, %c0_i32, %arg1 : i32, i32, i32
  }
  func.func @transform_1(%arg0: i32, %arg1: i32) -> (i32, i32) {
    %c0_i32 = arith.constant 0 : i32
    %c0_i32_0 = arith.constant 0 : i32
    %c0_i32_1 = arith.constant 0 : i32
    return %c0_i32, %c0_i32_0 : i32, i32
  }
  func.func @transform_2(%arg0: i32, %arg1: i32) -> (i32, i32) {
    %c0_i32 = arith.constant 0 : i32
    %c0_i32_0 = arith.constant 0 : i32
    %c0_i32_1 = arith.constant 0 : i32
    return %c0_i32, %c0_i32_0 : i32, i32
  }
  func.func @transform_3(%arg0: i32, %arg1: i32) -> (i32, i32) {
    %c0_i32 = arith.constant 0 : i32
    %c0_i32_0 = arith.constant 0 : i32
    %c0_i32_1 = arith.constant 0 : i32
    return %c0_i32, %c0_i32_0 : i32, i32
  }
  func.func @transform_4(%arg0: i32, %arg1: i32) -> (i32, i32) {
    %c0_i32 = arith.constant 0 : i32
    %c0_i32_0 = arith.constant 0 : i32
    %c0_i32_1 = arith.constant 0 : i32
    return %c0_i32, %c0_i32_0 : i32, i32
  }
  func.func @transform_5(%arg0: i32, %arg1: i32) -> (i32, i32) {
    %c0_i32 = arith.constant 0 : i32
    %c0_i32_0 = arith.constant 0 : i32
    %c0_i32_1 = arith.constant 0 : i32
    return %c0_i32, %c0_i32_0 : i32, i32
  }
  func.func @transform_6(%arg0: i32, %arg1: i32) -> (i32, i32) {
    %c0_i32 = arith.constant 0 : i32
    %c0_i32_0 = arith.constant 0 : i32
    %c0_i32_1 = arith.constant 0 : i32
    return %c0_i32, %c0_i32_0 : i32, i32
  }
  func.func @transform_7(%arg0: i32, %arg1: i32) -> (i32, i32, i32) {
    %c0_i32 = arith.constant 0 : i32
    %c0_i32_0 = arith.constant 0 : i32
    return %arg0, %c0_i32, %arg1 : i32, i32, i32
  }
}

</mosaic_0001>

<llo_original>
// kernel: discriminator_forward.1
$region0: #{discriminator_forward.1}
  #allocation0 [shape = 'u32[]', space=smem, size = 0x4, offset = 0x4, fixed_abs, tag = 'smem constant byte address 0x4 - core index']
  #allocation1 [shape = 'u32[144,128]{1,0:T(1,128)}', space=vmem, size = 0x12000, scoped, tag = 'internal scratch']
  #allocation2 [shape = 'f32[1,1]{1,0:T(1,128)S(1)}', space=vmem, size = 0x200, scoped, tag = 'scoped memory for discriminator_forward.1']
  %s0 = inlined_call_operand.vmem [shape: f32[2,6,256], index: 0, kind: input, shape index: {}]
  %s1 = inlined_call_operand.vmem [shape: bf16[64,6], index: 1, kind: input, shape index: {}]
  %s2 = inlined_call_operand.vmem [shape: f32[64,1], index: 2, kind: input, shape index: {}]
  %s3 = inlined_call_operand.vmem [shape: bf16[128,64], index: 3, kind: input, shape index: {}]
  %s4 = inlined_call_operand.vmem [shape: f32[128,1], index: 4, kind: input, shape index: {}]
  %s5 = inlined_call_operand.vmem [shape: bf16[1,128], index: 5, kind: input, shape index: {}]
  %s6 = inlined_call_operand.<no memory space> [shape: f32[1,1], index: 6, kind: input, shape index: {}]
  %s7 = inlined_call_operand.vmem [shape: f32[2,1,256], index: 7, kind: output, shape index: {}]
  %s8 = sld [smem:[#allocation0]]
  $region61: #{discriminator_forward.1} parent=0
    _
  %s10 = ssub.s32 1, %s8
  %s11 = scalar_select 0, %s10, %s8
  %v12 = vstv %s6
  %13 = vst [vmem:[#allocation2] sm:$0x1] %v12
  loop: start=0, step=1, limit=4
  $region2: #{discriminator_forward.1} parent=0 // loop_pre_header
    _
  $region3: #{discriminator_forward.1} parent=0 // loop_header
    %s15 = sphi 0, %s19
    %p16 = scmp.ge.s32.totalorder %s15, 4
    %s22 = sphi 0, %s34
    %s23 = sphi 0, %s30
    %s24 = sphi 0, %s22
    %s25 = sphi 0, %s23
    %s26 = sphi 0, %s24
    %s27 = sphi 0, %s25
    %s39 = sphi 0, %s41
    %s42 = sphi 0, %s39
    %s43 = sphi 0, %s42
    %s59 = sphi 0, %s43
    %s63 = sphi 0, %s63
    %s65 = sphi 0, %s63
    %s66 = sphi 0, %s65
    %s80 = sphi 0, %s66
    %s84 = sphi 0, %s84
    %s86 = sphi 0, %s84
    %s87 = sphi 0, %s86
    %s101 = sphi 0, %s87
    %s105 = sphi 0, %s105
    %s107 = sphi 0, %s105
    %s108 = sphi 0, %s107
    %s122 = sphi 0, %s108
    %s126 = sphi 0, %s126
    %s128 = sphi 0, %s126
    %s129 = sphi 0, %s128
    %s143 = sphi 0, %s129
    %s147 = sphi 0, %s147
    %s149 = sphi 0, %s147
    %s150 = sphi 0, %s149
    %s164 = sphi 0, %s150
    %s168 = sphi 0, %s168
    %s170 = sphi 0, %s168
    %s171 = sphi 0, %s170
    %s185 = sphi 0, %s171
    %s193 = sphi 0, %s195
    %s196 = sphi 0, %s193
    %s197 = sphi 0, %s196
    %s213 = sphi 0, %s197
  $region4: #{discriminator_forward.1} parent=0 // loop_header_branch
    %18 = sbr.rel (%p16) target = $region8
  $region5: #{discriminator_forward.1} parent=0 // loop_body
    %s20 = ssub.s32 %s15, 1
    %s21 = ssub.s32 %s15, 2
    %s28 = sadd.s32 1, %s23
    %p29 = scmp.ge.s32.totalorder %s28, 1
    %s30 = scalar_select %p29, 0, %s28
    %s31 = sadd.s32 1, %s22
    %s32 = scalar_select %p29, %s31, %s22
    %p33 = scmp.ge.s32.totalorder %s32, 2
    %s34 = scalar_select %p33, 0, %s32
    %s35 = ssub.s32 %s22, %s34
    %s36 = ssub.s32 %s23, %s30
    %s37 = sor.u32 %s35, %s36
    %p38 = scmp.eq.s32.totalorder %s37, 0
    %s40 = sadd.s32 %s39, 1
    %s41 = scalar_select %p38, %s39, %s40
    %p44 = pneg %p38
    %p45 = scmp.eq.s32.totalorder %s15, 1
    %p46 = por %p44, %p45
    %p47 = scmp.ne.s32.totalorder %s39, %s42
    %p48 = scmp.eq.s32.totalorder %s15, 0
    %p49 = por %p47, %p48
    %p50 = scmp.ne.s32.totalorder %s39, %s42
    %p51 = scmp.eq.s32.totalorder %s20, 1
    %p52 = por %p50, %p51
    %p53 = scmp.ne.s32.totalorder %s42, %s43
    %p54 = scmp.eq.s32.totalorder %s20, 0
    %p55 = por %p53, %p54
    %p56 = scmp.ne.s32.totalorder %s42, %s43
    %p57 = scmp.eq.s32.totalorder %s21, 1
    %p58 = por %p56, %p57
    %p60 = scmp.ne.s32.totalorder %s43, %s59
    %p61 = scmp.eq.s32.totalorder %s21, 0
    %p62 = por %p60, %p61
    %s64 = sadd.s32 %s63, 1
    %p67 = scmp.eq.s32.totalorder %s15, 1
    %p68 = scmp.ne.s32.totalorder %s63, %s65
    %p69 = scmp.eq.s32.totalorder %s15, 0
    %p70 = por %p68, %p69
    %p71 = scmp.ne.s32.totalorder %s63, %s65
    %p72 = scmp.eq.s32.totalorder %s20, 1
    %p73 = por %p71, %p72
    %p74 = scmp.ne.s32.totalorder %s65, %s66
    %p75 = scmp.eq.s32.totalorder %s20, 0
    %p76 = por %p74, %p75
    %p77 = scmp.ne.s32.totalorder %s65, %s66
    %p78 = scmp.eq.s32.totalorder %s21, 1
    %p79 = por %p77, %p78
    %p81 = scmp.ne.s32.totalorder %s66, %s80
    %p82 = scmp.eq.s32.totalorder %s21, 0
    %p83 = por %p81, %p82
    %s85 = sadd.s32 %s84, 1
    %p88 = scmp.eq.s32.totalorder %s15, 1
    %p89 = scmp.ne.s32.totalorder %s84, %s86
    %p90 = scmp.eq.s32.totalorder %s15, 0
    %p91 = por %p89, %p90
    %p92 = scmp.ne.s32.totalorder %s84, %s86
    %p93 = scmp.eq.s32.totalorder %s20, 1
    %p94 = por %p92, %p93
    %p95 = scmp.ne.s32.totalorder %s86, %s87
    %p96 = scmp.eq.s32.totalorder %s20, 0
    %p97 = por %p95, %p96
    %p98 = scmp.ne.s32.totalorder %s86, %s87
    %p99 = scmp.eq.s32.totalorder %s21, 1
    %p100 = por %p98, %p99
    %p102 = scmp.ne.s32.totalorder %s87, %s101
    %p103 = scmp.eq.s32.totalorder %s21, 0
    %p104 = por %p102, %p103
    %s106 = sadd.s32 %s105, 1
    %p109 = scmp.eq.s32.totalorder %s15, 1
    %p110 = scmp.ne.s32.totalorder %s105, %s107
    %p111 = scmp.eq.s32.totalorder %s15, 0
    %p112 = por %p110, %p111
    %p113 = scmp.ne.s32.totalorder %s105, %s107
    %p114 = scmp.eq.s32.totalorder %s20, 1
    %p115 = por %p113, %p114
    %p116 = scmp.ne.s32.totalorder %s107, %s108
    %p117 = scmp.eq.s32.totalorder %s20, 0
    %p118 = por %p116, %p117
    %p119 = scmp.ne.s32.totalorder %s107, %s108
    %p120 = scmp.eq.s32.totalorder %s21, 1
    %p121 = por %p119, %p120
    %p123 = scmp.ne.s32.totalorder %s108, %s122
    %p124 = scmp.eq.s32.totalorder %s21, 0
    %p125 = por %p123, %p124
    %s127 = sadd.s32 %s126, 1
    %p130 = scmp.eq.s32.totalorder %s15, 1
    %p131 = scmp.ne.s32.totalorder %s126, %s128
    %p132 = scmp.eq.s32.totalorder %s15, 0
    %p133 = por %p131, %p132
    %p134 = scmp.ne.s32.totalorder %s126, %s128
    %p135 = scmp.eq.s32.totalorder %s20, 1
    %p136 = por %p134, %p135
    %p137 = scmp.ne.s32.totalorder %s128, %s129
    %p138 = scmp.eq.s32.totalorder %s20, 0
    %p139 = por %p137, %p138
    %p140 = scmp.ne.s32.totalorder %s128, %s129
    %p141 = scmp.eq.s32.totalorder %s21, 1
    %p142 = por %p140, %p141
    %p144 = scmp.ne.s32.totalorder %s129, %s143
    %p145 = scmp.eq.s32.totalorder %s21, 0
    %p146 = por %p144, %p145
    %s148 = sadd.s32 %s147, 1
    %p151 = scmp.eq.s32.totalorder %s15, 1
    %p152 = scmp.ne.s32.totalorder %s147, %s149
    %p153 = scmp.eq.s32.totalorder %s15, 0
    %p154 = por %p152, %p153
    %p155 = scmp.ne.s32.totalorder %s147, %s149
    %p156 = scmp.eq.s32.totalorder %s20, 1
    %p157 = por %p155, %p156
    %p158 = scmp.ne.s32.totalorder %s149, %s150
    %p159 = scmp.eq.s32.totalorder %s20, 0
    %p160 = por %p158, %p159
    %p161 = scmp.ne.s32.totalorder %s149, %s150
    %p162 = scmp.eq.s32.totalorder %s21, 1
    %p163 = por %p161, %p162
    %p165 = scmp.ne.s32.totalorder %s150, %s164
    %p166 = scmp.eq.s32.totalorder %s21, 0
    %p167 = por %p165, %p166
    %s169 = sadd.s32 %s168, 1
    %p172 = scmp.eq.s32.totalorder %s15, 1
    %p173 = scmp.ne.s32.totalorder %s168, %s170
    %p174 = scmp.eq.s32.totalorder %s15, 0
    %p175 = por %p173, %p174
    %p176 = scmp.ne.s32.totalorder %s168, %s170
    %p177 = scmp.eq.s32.totalorder %s20, 1
    %p178 = por %p176, %p177
    %p179 = scmp.ne.s32.totalorder %s170, %s171
    %p180 = scmp.eq.s32.totalorder %s20, 0
    %p181 = por %p179, %p180
    %p182 = scmp.ne.s32.totalorder %s170, %s171
    %p183 = scmp.eq.s32.totalorder %s21, 1
    %p184 = por %p182, %p183
    %p186 = scmp.ne.s32.totalorder %s171, %s185
    %p187 = scmp.eq.s32.totalorder %s21, 0
    %p188 = por %p186, %p187
    %s189 = ssub.s32 %s22, %s34
    %s190 = ssub.s32 %s23, %s30
    %s191 = sor.u32 %s189, %s190
    %p192 = scmp.eq.s32.totalorder %s191, 0
    %s194 = sadd.s32 %s193, 1
    %s195 = scalar_select %p192, %s193, %s194
    %p198 = pneg %p192
    %p199 = scmp.eq.s32.totalorder %s15, 1
    %p200 = por %p198, %p199
    %p201 = scmp.ne.s32.totalorder %s193, %s196
    %p202 = scmp.eq.s32.totalorder %s15, 0
    %p203 = por %p201, %p202
    %p204 = scmp.ne.s32.totalorder %s193, %s196
    %p205 = scmp.eq.s32.totalorder %s20, 1
    %p206 = por %p204, %p205
    %p207 = scmp.ne.s32.totalorder %s196, %s197
    %p208 = scmp.eq.s32.totalorder %s20, 0
    %p209 = por %p207, %p208
    %p210 = scmp.ne.s32.totalorder %s196, %s197
    %p211 = scmp.eq.s32.totalorder %s21, 1
    %p212 = por %p210, %p211
    %p214 = scmp.ne.s32.totalorder %s197, %s213
    %p215 = scmp.eq.s32.totalorder %s21, 0
    %p216 = por %p214, %p215
    %p217 = scmp.le.s32.totalorder 1, %s15
    %p218 = scmp.lt.s32.totalorder %s15, 3
    %p219 = pnand %p217, %p218
    %p220 = pneg %p219
    // Predicated region
    $region9: #{discriminator_forward.1} parent=5 // pred_check
      _
    $region10: #{discriminator_forward.1} parent=5 // pred_check_branch
      %222 = sbr.rel (%p219) target = $region12
    $region11: #{discriminator_forward.1} parent=5 // pred_region
      %s223 = ssub.s32 %s15, 1
      // Predicated region
      $region13: #{discriminator_forward.1} parent=11 // pred_check
        %p224 = pneg %p76
      $region14: #{discriminator_forward.1} parent=11 // pred_check_branch
        %226 = sbr.rel (%p224) target = $region16
      $region15: #{discriminator_forward.1} parent=11 // pred_region
        _
      $region16: #{discriminator_forward.1} parent=11 // pred_fallthru
        _
      // Predicated region
      $region17: #{discriminator_forward.1} parent=11 // pred_check
        %p227 = pneg %p97
      $region18: #{discriminator_forward.1} parent=11 // pred_check_branch
        %229 = sbr.rel (%p227) target = $region20
      $region19: #{discriminator_forward.1} parent=11 // pred_region
        _
      $region20: #{discriminator_forward.1} parent=11 // pred_fallthru
        _
      // Predicated region
      $region21: #{discriminator_forward.1} parent=11 // pred_check
        %p230 = pneg %p118
      $region22: #{discriminator_forward.1} parent=11 // pred_check_branch
        %232 = sbr.rel (%p230) target = $region24
      $region23: #{discriminator_forward.1} parent=11 // pred_region
        _
      $region24: #{discriminator_forward.1} parent=11 // pred_fallthru
        _
      // Predicated region
      $region25: #{discriminator_forward.1} parent=11 // pred_check
        %p233 = pneg %p139
      $region26: #{discriminator_forward.1} parent=11 // pred_check_branch
        %235 = sbr.rel (%p233) target = $region28
      $region27: #{discriminator_forward.1} parent=11 // pred_region
        _
      $region28: #{discriminator_forward.1} parent=11 // pred_fallthru
        _
      // Predicated region
      $region29: #{discriminator_forward.1} parent=11 // pred_check
        %p236 = pneg %p160
      $region30: #{discriminator_forward.1} parent=11 // pred_check_branch
        %238 = sbr.rel (%p236) target = $region32
      $region31: #{discriminator_forward.1} parent=11 // pred_region
        _
      $region32: #{discriminator_forward.1} parent=11 // pred_fallthru
        _
      // Predicated region
      $region33: #{discriminator_forward.1} parent=11 // pred_check
        %p239 = pneg %p181
      $region34: #{discriminator_forward.1} parent=11 // pred_check_branch
        %241 = sbr.rel (%p239) target = $region36
      $region35: #{discriminator_forward.1} parent=11 // pred_region
        _
      $region36: #{discriminator_forward.1} parent=11 // pred_fallthru
        _
    $region12: #{discriminator_forward.1} parent=5 // pred_fallthru
      _
    %p242 = scmp.lt.s32.totalorder %s15, 2
    // Predicated region
    $region37: #{discriminator_forward.1} parent=5 // pred_check
      %p243 = pneg %p242
    $region38: #{discriminator_forward.1} parent=5 // pred_check_branch
      %245 = sbr.rel (%p243) target = $region40
    $region39: #{discriminator_forward.1} parent=5 // pred_region
      // Predicated region
      $region41: #{discriminator_forward.1} parent=39 // pred_check
        %p246 = pneg %p49
      $region42: #{discriminator_forward.1} parent=39 // pred_check_branch
        %248 = sbr.rel (%p246) target = $region44
      $region43: #{discriminator_forward.1} parent=39 // pred_region
        %s249 = smul.u32 2, %s23
        %p250 = scmp.lt.s32.totalorder %s22, 1
        %s251 = scalar_select %p250, %s22, 1
        %p252 = scmp.lt.s32.totalorder %s249, 1
        %s253 = scalar_select %p252, %s249, 1
        %s254 = smul.addr %s251, 2
        %s255 = sadd.s32 %s253, %s254
        %s256 = smul.addr %s255, 8
        %s257 = scalar_lea.vmem %s0, %s256
        %s258 = smul.u32 2, %s23
      $region44: #{discriminator_forward.1} parent=39 // pred_fallthru
        _
    $region40: #{discriminator_forward.1} parent=5 // pred_fallthru
      _
    %p259 = scmp.le.s32.totalorder 1, %s15
    %p260 = scmp.lt.s32.totalorder %s15, 3
    %p261 = pnand %p259, %p260
    %p262 = pneg %p261
    // Predicated region
    $region45: #{discriminator_forward.1} parent=5 // pred_check
      _
    $region46: #{discriminator_forward.1} parent=5 // pred_check_branch
      %264 = sbr.rel (%p261) target = $region48
    $region47: #{discriminator_forward.1} parent=5 // pred_region
      %s265 = ssub.s32 %s15, 1
      %s266 = smul.u32 2, %s25
      %p267 = scmp.lt.s32.totalorder %s24, 1
      %s268 = scalar_select %p267, %s24, 1
      %p269 = scmp.lt.s32.totalorder %s266, 1
      %s270 = scalar_select %p269, %s266, 1
      %s271 = smul.addr %s268, 2
      %s272 = sadd.s32 %s270, %s271
      %s273 = smul.addr %s272, 8
      %s274 = scalar_lea.vmem %s0, %s273
      %p275 = pneg %p55
      %p276 = pneg %p52
      %p277 = pneg %p76
      %p278 = pneg %p73
      %p279 = pneg %p97
      %p280 = pneg %p94
      %p281 = pneg %p118
      %p282 = pneg %p115
      %p283 = pneg %p139
      %p284 = pneg %p136
      %p285 = pneg %p160
      %p286 = pneg %p157
      %p287 = pneg %p181
      %p288 = pneg %p178
      %p289 = pneg %p209
      %p290 = pneg %p206
      %s291 = smul.u32 2, %s25
      %p292 = scmp.lt.s32.totalorder %s24, 1
      %s293 = scalar_select %p292, %s24, 1
      %p294 = scmp.lt.s32.totalorder %s291, 1
      %s295 = scalar_select %p294, %s291, 1
      %s296 = smul.addr %s293, 2
      %s297 = sadd.s32 %s295, %s296
      %s298 = scalar_lea.vmem %s7, %s297
      %s299 = smul.u32 2, %s25
      %p300 = scmp.lt.s32.totalorder %s24, 1
      %s301 = scalar_select %p300, %s24, 1
      %p302 = scmp.lt.s32.totalorder %s299, 1
      %s303 = scalar_select %p302, %s299, 1
      %s304 = smul.addr %s301, 2
      %s305 = sadd.s32 %s303, %s304
      %s306 = smul.addr %s305, 8
      %s307 = scalar_lea.vmem %s0, %s306
      %s308 = smul.u32 2, %s25
      %s309 = smul.u32 2, %s25
      %p310 = scmp.lt.s32.totalorder %s24, 1
      %s311 = scalar_select %p310, %s24, 1
      %p312 = scmp.lt.s32.totalorder %s309, 1
      %s313 = scalar_select %p312, %s309, 1
      %s314 = smul.addr %s311, 2
      %s315 = sadd.s32 %s313, %s314
      %s316 = scalar_lea.vmem %s7, %s315
      %s317 = smul.u32 2, %s25
      %v319 = vld [vmem:[%s307] sm:$0x3f]
      %v320 = vld [vmem:[%s307 + $0x8] sm:$0x3f]
      %v321 = vpack.c.bf16 %v319, %v319
      %v322 = vpack.c.bf16 %v320, %v320
      %v323 = vld [vmem:[%s1] sm:$0xf]
      %v324 = vld [vmem:[%s1 + $0x4] sm:$0xf]
      %v325 = vld [vmem:[%s1 + $0x8] sm:$0xf]
      %v326 = vld [vmem:[%s1 + $0xc] sm:$0xf]
      %v327 = vld [vmem:[%s1 + $0x10] sm:$0xf]
      %v328 = vld [vmem:[%s1 + $0x14] sm:$0xf]
      %v329 = vld [vmem:[%s1 + $0x18] sm:$0xf]
      %v330 = vld [vmem:[%s1 + $0x1c] sm:$0xf]
      %v331 = vld [vmem:[%s2] sm:$0xff]
      %v332 = vld [vmem:[%s2 + $0x8] sm:$0xff]
      %v333 = vld [vmem:[%s2 + $0x10] sm:$0xff]
      %v334 = vld [vmem:[%s2 + $0x18] sm:$0xff]
      %v335 = vld [vmem:[%s2 + $0x20] sm:$0xff]
      %v336 = vld [vmem:[%s2 + $0x28] sm:$0xff]
      %v337 = vld [vmem:[%s2 + $0x30] sm:$0xff]
      %v338 = vld [vmem:[%s2 + $0x38] sm:$0xff]
      %340 = vset.pattern.permute.xlu0 0
      %341 = vperm.xlu0 %340, %v331
      %v342 = vpop.permute.xlu0 %341
      %345 = vset.pattern.permute.xlu0 0
      %346 = vperm.xlu0 %345, %v332
      %v347 = vpop.permute.xlu0 %346
      %350 = vset.pattern.permute.xlu0 0
      %351 = vperm.xlu0 %350, %v333
      %v352 = vpop.permute.xlu0 %351
      %355 = vset.pattern.permute.xlu0 0
      %356 = vperm.xlu0 %355, %v334
      %v357 = vpop.permute.xlu0 %356
      %360 = vset.pattern.permute.xlu0 0
      %361 = vperm.xlu0 %360, %v335
      %v362 = vpop.permute.xlu0 %361
      %365 = vset.pattern.permute.xlu0 0
      %366 = vperm.xlu0 %365, %v336
      %v367 = vpop.permute.xlu0 %366
      %370 = vset.pattern.permute.xlu0 0
      %371 = vperm.xlu0 %370, %v337
      %v372 = vpop.permute.xlu0 %371
      %375 = vset.pattern.permute.xlu0 0
      %376 = vperm.xlu0 %375, %v338
      %v377 = vpop.permute.xlu0 %376
      %v387 = vunpack.c.l.b16 %v323
      %v388 = vunpack.c.l.b16 %v324
      %v389 = vunpack.c.l.b16 %v325
      %v390 = vunpack.c.l.b16 %v326
      %v391 = vunpack.c.l.b16 %v327
      %v392 = vunpack.c.l.b16 %v328
      %v393 = vunpack.c.l.b16 %v329
      %v394 = vunpack.c.l.b16 %v330
      %v395 = vpack.c.b16 %v388, %v387
      %v396 = vpack.c.b16 %v390, %v389
      %v397 = vpack.c.b16 %v392, %v391
      %v398 = vpack.c.b16 %v394, %v393
      %vm399 = vcmask 48128
      %v401 = vsel %vm399, %v395, 0
      %v404 = vsel %vm399, %v396, 0
      %v407 = vsel %vm399, %v397, 0
      %v410 = vsel %vm399, %v398, 0
      %vm412 = vcmask 1042432
      %v414 = vsel %vm412, %v321, 0
      %v417 = vsel %vm412, %v322, 0
      %419 = vmatprep.subr.bf16.mxu0 %v417
      %420 = vmatpush1.bf16.msra.mxu0 %v414
      %421 = vmatprep.subr.bf16.mxu0 0
      %422 = vmatpush1.bf16.msra.mxu0 0
      %423 = vmatprep.subr.bf16.mxu0 0
      %424 = vmatpush1.bf16.msra.mxu0 0
      %425 = vmatprep.subr.bf16.mxu0 0
      %426 = vmatpush1.bf16.msra.mxu0 0
      %427 = vmatprep.subr.bf16.mxu0 0
      %428 = vmatpush1.bf16.msra.mxu0 0
      %429 = vmatprep.subr.bf16.mxu0 0
      %430 = vmatpush1.bf16.msra.mxu0 0
      %431 = vmatprep.subr.bf16.mxu0 0
      %432 = vmatpush1.bf16.msra.mxu0 0
      %433 = vmatprep.subr.bf16.mxu0 0
      %434 = vmatpush1.bf16.msra.mxu0 0
      %435 = vmatprep.subr.bf16.mxu0 0
      %436 = vmatpush1.bf16.msra.mxu0 0
      %437 = vmatprep.subr.bf16.mxu0 0
      %438 = vmatpush1.bf16.msra.mxu0 0
      %439 = vmatprep.subr.bf16.mxu0 0
      %440 = vmatpush1.bf16.msra.mxu0 0
      %441 = vmatprep.subr.bf16.mxu0 0
      %442 = vmatpush1.bf16.msra.mxu0 0
      %443 = vmatprep.subr.bf16.mxu0 0
      %444 = vmatpush1.bf16.msra.mxu0 0
      %445 = vmatprep.subr.bf16.mxu0 0
      %446 = vmatpush1.bf16.msra.mxu0 0
      %447 = vmatprep.subr.bf16.mxu0 0
      %448 = vmatpush1.bf16.msra.mxu0 0
      %449 = vmatprep.subr.bf16.mxu0 0
      %450 = vmatpush1.bf16.msra.mxu0 0
      %451 = vmatprep.mubr.bf16.mxu0 0
      %452 = vmatmul.mubr.bf16.gmra.mrb[0].mxu0 %v401
      %v453 = vpop.f32.mrb[0].mxu0
      %v454 = vadd.f32 %v342, %v453
      %v455 = vpop.f32.mrb[0].mxu0
      %v456 = vadd.f32 %v342, %v455
      %v457 = vpop.f32.mrb[0].mxu0
      %v458 = vadd.f32 %v347, %v457
      %v459 = vpop.f32.mrb[0].mxu0
      %v460 = vadd.f32 %v347, %v459
      %461 = vmatprep.mubr.bf16.mxu0 0
      %462 = vmatmul.mubr.bf16.gmra.mrb[0].mxu0 %v404
      %v463 = vpop.f32.mrb[0].mxu0
      %v464 = vadd.f32 %v352, %v463
      %v465 = vpop.f32.mrb[0].mxu0
      %v466 = vadd.f32 %v352, %v465
      %v467 = vpop.f32.mrb[0].mxu0
      %v468 = vadd.f32 %v357, %v467
      %v469 = vpop.f32.mrb[0].mxu0
      %v470 = vadd.f32 %v357, %v469
      %471 = vmatprep.mubr.bf16.mxu0 0
      %472 = vmatmul.mubr.bf16.gmra.mrb[0].mxu0 %v407
      %v473 = vpop.f32.mrb[0].mxu0
      %v474 = vadd.f32 %v362, %v473
      %v475 = vpop.f32.mrb[0].mxu0
      %v476 = vadd.f32 %v362, %v475
      %v477 = vpop.f32.mrb[0].mxu0
      %v478 = vadd.f32 %v367, %v477
      %v479 = vpop.f32.mrb[0].mxu0
      %v480 = vadd.f32 %v367, %v479
      %481 = vmatprep.mubr.bf16.mxu0 0
      %482 = vmatmul.mubr.bf16.gmra.mrb[0].mxu0 %v410
      %v483 = vpop.f32.mrb[0].mxu0
      %v484 = vadd.f32 %v372, %v483
      %v485 = vpop.f32.mrb[0].mxu0
      %v486 = vadd.f32 %v372, %v485
      %v487 = vpop.f32.mrb[0].mxu0
      %v488 = vadd.f32 %v377, %v487
      %v489 = vpop.f32.mrb[0].mxu0
      %v490 = vadd.f32 %v377, %v489
      %491 = vdwg.mxu0
      %v492 = vmul.f32 %v454, 0.2
      %v493 = vmul.f32 %v456, 0.2
      %v494 = vmul.f32 %v458, 0.2
      %v495 = vmul.f32 %v460, 0.2
      %v496 = vmul.f32 %v464, 0.2
      %v497 = vmul.f32 %v466, 0.2
      %v498 = vmul.f32 %v468, 0.2
      %v499 = vmul.f32 %v470, 0.2
      %v500 = vmul.f32 %v474, 0.2
      %v501 = vmul.f32 %v476, 0.2
      %v502 = vmul.f32 %v478, 0.2
      %v503 = vmul.f32 %v480, 0.2
      %v504 = vmul.f32 %v484, 0.2
      %v505 = vmul.f32 %v486, 0.2
      %v506 = vmul.f32 %v488, 0.2
      %v507 = vmul.f32 %v490, 0.2
      %v508 = vmax.f32 %v454, %v492
      %v509 = vmax.f32 %v456, %v493
      %v510 = vmax.f32 %v458, %v494
      %v511 = vmax.f32 %v460, %v495
      %v512 = vmax.f32 %v464, %v496
      %v513 = vmax.f32 %v466, %v497
      %v514 = vmax.f32 %v468, %v498
      %v515 = vmax.f32 %v470, %v499
      %v516 = vmax.f32 %v474, %v500
      %v517 = vmax.f32 %v476, %v501
      %v518 = vmax.f32 %v478, %v502
      %v519 = vmax.f32 %v480, %v503
      %v520 = vmax.f32 %v484, %v504
      %v521 = vmax.f32 %v486, %v505
      %v522 = vmax.f32 %v488, %v506
      %v523 = vmax.f32 %v490, %v507
      %v524 = vld [vmem:[%s3] sm:$0xf]
      %v525 = vld [vmem:[%s3 + $0x4] sm:$0xf]
      %v526 = vld [vmem:[%s3 + $0x8] sm:$0xf]
      %v527 = vld [vmem:[%s3 + $0xc] sm:$0xf]
      %v528 = vld [vmem:[%s3 + $0x10] sm:$0xf]
      %v529 = vld [vmem:[%s3 + $0x14] sm:$0xf]
      %v530 = vld [vmem:[%s3 + $0x18] sm:$0xf]
      %v531 = vld [vmem:[%s3 + $0x1c] sm:$0xf]
      %v532 = vld [vmem:[%s3 + $0x20] sm:$0xf]
      %v533 = vld [vmem:[%s3 + $0x24] sm:$0xf]
      %v534 = vld [vmem:[%s3 + $0x28] sm:$0xf]
      %v535 = vld [vmem:[%s3 + $0x2c] sm:$0xf]
      %v536 = vld [vmem:[%s3 + $0x30] sm:$0xf]
      %v537 = vld [vmem:[%s3 + $0x34] sm:$0xf]
      %v538 = vld [vmem:[%s3 + $0x38] sm:$0xf]
      %v539 = vld [vmem:[%s3 + $0x3c] sm:$0xf]
      %v540 = vpack.c.bf16 %v510, %v508
      %v541 = vpack.c.bf16 %v511, %v509
      %v542 = vpack.c.bf16 %v514, %v512
      %v543 = vpack.c.bf16 %v515, %v513
      %v544 = vpack.c.bf16 %v518, %v516
      %v545 = vpack.c.bf16 %v519, %v517
      %v546 = vpack.c.bf16 %v522, %v520
      %v547 = vpack.c.bf16 %v523, %v521
      %v548 = vld [vmem:[%s4] sm:$0xff]
      %v549 = vld [vmem:[%s4 + $0x8] sm:$0xff]
      %v550 = vld [vmem:[%s4 + $0x10] sm:$0xff]
      %v551 = vld [vmem:[%s4 + $0x18] sm:$0xff]
      %v552 = vld [vmem:[%s4 + $0x20] sm:$0xff]
      %v553 = vld [vmem:[%s4 + $0x28] sm:$0xff]
      %v554 = vld [vmem:[%s4 + $0x30] sm:$0xff]
      %v555 = vld [vmem:[%s4 + $0x38] sm:$0xff]
      %v556 = vld [vmem:[%s4 + $0x40] sm:$0xff]
      %v557 = vld [vmem:[%s4 + $0x48] sm:$0xff]
      %v558 = vld [vmem:[%s4 + $0x50] sm:$0xff]
      %v559 = vld [vmem:[%s4 + $0x58] sm:$0xff]
      %v560 = vld [vmem:[%s4 + $0x60] sm:$0xff]
      %v561 = vld [vmem:[%s4 + $0x68] sm:$0xff]
      %v562 = vld [vmem:[%s4 + $0x70] sm:$0xff]
      %v563 = vld [vmem:[%s4 + $0x78] sm:$0xff]
      %565 = vset.pattern.permute.xlu0 0
      %566 = vperm.xlu0 %565, %v548
      %v567 = vpop.permute.xlu0 %566
      %570 = vset.pattern.permute.xlu0 0
      %571 = vperm.xlu0 %570, %v549
      %v572 = vpop.permute.xlu0 %571
      %575 = vset.pattern.permute.xlu0 0
      %576 = vperm.xlu0 %575, %v550
      %v577 = vpop.permute.xlu0 %576
      %580 = vset.pattern.permute.xlu0 0
      %581 = vperm.xlu0 %580, %v551
      %v582 = vpop.permute.xlu0 %581
      %585 = vset.pattern.permute.xlu0 0
      %586 = vperm.xlu0 %585, %v552
      %v587 = vpop.permute.xlu0 %586
      %590 = vset.pattern.permute.xlu0 0
      %591 = vperm.xlu0 %590, %v553
      %v592 = vpop.permute.xlu0 %591
      %595 = vset.pattern.permute.xlu0 0
      %596 = vperm.xlu0 %595, %v554
      %v597 = vpop.permute.xlu0 %596
      %600 = vset.pattern.permute.xlu0 0
      %601 = vperm.xlu0 %600, %v555
      %v602 = vpop.permute.xlu0 %601
      %605 = vset.pattern.permute.xlu0 0
      %606 = vperm.xlu0 %605, %v556
      %v607 = vpop.permute.xlu0 %606
      %610 = vset.pattern.permute.xlu0 0
      %611 = vperm.xlu0 %610, %v557
      %v612 = vpop.permute.xlu0 %611
      %615 = vset.pattern.permute.xlu0 0
      %616 = vperm.xlu0 %615, %v558
      %v617 = vpop.permute.xlu0 %616
      %620 = vset.pattern.permute.xlu0 0
      %621 = vperm.xlu0 %620, %v559
      %v622 = vpop.permute.xlu0 %621
      %625 = vset.pattern.permute.xlu0 0
      %626 = vperm.xlu0 %625, %v560
      %v627 = vpop.permute.xlu0 %626
      %630 = vset.pattern.permute.xlu0 0
      %631 = vperm.xlu0 %630, %v561
      %v632 = vpop.permute.xlu0 %631
      %635 = vset.pattern.permute.xlu0 0
      %636 = vperm.xlu0 %635, %v562
      %v637 = vpop.permute.xlu0 %636
      %640 = vset.pattern.permute.xlu0 0
      %641 = vperm.xlu0 %640, %v563
      %v642 = vpop.permute.xlu0 %641
      %v660 = vunpack.c.l.b16 %v524
      %v661 = vunpack.c.l.b16 %v525
      %v662 = vunpack.c.l.b16 %v526
      %v663 = vunpack.c.l.b16 %v527
      %v664 = vunpack.c.l.b16 %v528
      %v665 = vunpack.c.l.b16 %v529
      %v666 = vunpack.c.l.b16 %v530
      %v667 = vunpack.c.l.b16 %v531
      %v668 = vunpack.c.l.b16 %v532
      %v669 = vunpack.c.l.b16 %v533
      %v670 = vunpack.c.l.b16 %v534
      %v671 = vunpack.c.l.b16 %v535
      %v672 = vunpack.c.l.b16 %v536
      %v673 = vunpack.c.l.b16 %v537
      %v674 = vunpack.c.l.b16 %v538
      %v675 = vunpack.c.l.b16 %v539
      %v676 = vpack.c.b16 %v661, %v660
      %v677 = vpack.c.b16 %v663, %v662
      %v678 = vpack.c.b16 %v665, %v664
      %v679 = vpack.c.b16 %v667, %v666
      %v680 = vpack.c.b16 %v669, %v668
      %v681 = vpack.c.b16 %v671, %v670
      %v682 = vpack.c.b16 %v673, %v672
      %v683 = vpack.c.b16 %v675, %v674
      %vm684 = vcmask 523264
      %v686 = vsel %vm684, %v676, 0
      %v689 = vsel %vm684, %v677, 0
      %v692 = vsel %vm684, %v678, 0
      %v695 = vsel %vm684, %v679, 0
      %v698 = vsel %vm684, %v680, 0
      %v701 = vsel %vm684, %v681, 0
      %v704 = vsel %vm684, %v682, 0
      %v707 = vsel %vm684, %v683, 0
      %709 = vmatprep.subr.bf16.mxu0 %v541
      %710 = vmatpush1.bf16.msra.mxu0 %v540
      %711 = vmatprep.subr.bf16.mxu0 %v543
      %712 = vmatpush1.bf16.msra.mxu0 %v542
      %713 = vmatprep.subr.bf16.mxu0 %v545
      %714 = vmatpush1.bf16.msra.mxu0 %v544
      %715 = vmatprep.subr.bf16.mxu0 %v547
      %716 = vmatpush1.bf16.msra.mxu0 %v546
      %717 = vmatprep.subr.bf16.mxu0 0
      %718 = vmatpush1.bf16.msra.mxu0 0
      %719 = vmatprep.subr.bf16.mxu0 0
      %720 = vmatpush1.bf16.msra.mxu0 0
      %721 = vmatprep.subr.bf16.mxu0 0
      %722 = vmatpush1.bf16.msra.mxu0 0
      %723 = vmatprep.subr.bf16.mxu0 0
      %724 = vmatpush1.bf16.msra.mxu0 0
      %725 = vmatprep.subr.bf16.mxu0 0
      %726 = vmatpush1.bf16.msra.mxu0 0
      %727 = vmatprep.subr.bf16.mxu0 0
      %728 = vmatpush1.bf16.msra.mxu0 0
      %729 = vmatprep.subr.bf16.mxu0 0
      %730 = vmatpush1.bf16.msra.mxu0 0
      %731 = vmatprep.subr.bf16.mxu0 0
      %732 = vmatpush1.bf16.msra.mxu0 0
      %733 = vmatprep.subr.bf16.mxu0 0
      %734 = vmatpush1.bf16.msra.mxu0 0
      %735 = vmatprep.subr.bf16.mxu0 0
      %736 = vmatpush1.bf16.msra.mxu0 0
      %737 = vmatprep.subr.bf16.mxu0 0
      %738 = vmatpush1.bf16.msra.mxu0 0
      %739 = vmatprep.subr.bf16.mxu0 0
      %740 = vmatpush1.bf16.msra.mxu0 0
      %741 = vmatprep.mubr.bf16.mxu0 0
      %742 = vmatmul.mubr.bf16.gmra.mrb[0].mxu0 %v686
      %v743 = vpop.f32.mrb[0].mxu0
      %v744 = vadd.f32 %v567, %v743
      %v745 = vpop.f32.mrb[0].mxu0
      %v746 = vadd.f32 %v567, %v745
      %v747 = vpop.f32.mrb[0].mxu0
      %v748 = vadd.f32 %v572, %v747
      %v749 = vpop.f32.mrb[0].mxu0
      %v750 = vadd.f32 %v572, %v749
      %751 = vmatprep.mubr.bf16.mxu0 0
      %752 = vmatmul.mubr.bf16.gmra.mrb[0].mxu0 %v689
      %v753 = vpop.f32.mrb[0].mxu0
      %v754 = vadd.f32 %v577, %v753
      %v755 = vpop.f32.mrb[0].mxu0
      %v756 = vadd.f32 %v577, %v755
      %v757 = vpop.f32.mrb[0].mxu0
      %v758 = vadd.f32 %v582, %v757
      %v759 = vpop.f32.mrb[0].mxu0
      %v760 = vadd.f32 %v582, %v759
      %761 = vmatprep.mubr.bf16.mxu0 0
      %762 = vmatmul.mubr.bf16.gmra.mrb[0].mxu0 %v692
      %v763 = vpop.f32.mrb[0].mxu0
      %v764 = vadd.f32 %v587, %v763
      %v765 = vpop.f32.mrb[0].mxu0
      %v766 = vadd.f32 %v587, %v765
      %v767 = vpop.f32.mrb[0].mxu0
      %v768 = vadd.f32 %v592, %v767
      %v769 = vpop.f32.mrb[0].mxu0
      %v770 = vadd.f32 %v592, %v769
      %771 = vmatprep.mubr.bf16.mxu0 0
      %772 = vmatmul.mubr.bf16.gmra.mrb[0].mxu0 %v695
      %v773 = vpop.f32.mrb[0].mxu0
      %v774 = vadd.f32 %v597, %v773
      %v775 = vpop.f32.mrb[0].mxu0
      %v776 = vadd.f32 %v597, %v775
      %v777 = vpop.f32.mrb[0].mxu0
      %v778 = vadd.f32 %v602, %v777
      %v779 = vpop.f32.mrb[0].mxu0
      %v780 = vadd.f32 %v602, %v779
      %781 = vmatprep.mubr.bf16.mxu0 0
      %782 = vmatmul.mubr.bf16.gmra.mrb[0].mxu0 %v698
      %v783 = vpop.f32.mrb[0].mxu0
      %v784 = vadd.f32 %v607, %v783
      %v785 = vpop.f32.mrb[0].mxu0
      %v786 = vadd.f32 %v607, %v785
      %v787 = vpop.f32.mrb[0].mxu0
      %v788 = vadd.f32 %v612, %v787
      %v789 = vpop.f32.mrb[0].mxu0
      %v790 = vadd.f32 %v612, %v789
      %791 = vmatprep.mubr.bf16.mxu0 0
      %792 = vmatmul.mubr.bf16.gmra.mrb[0].mxu0 %v701
      %v793 = vpop.f32.mrb[0].mxu0
      %v794 = vadd.f32 %v617, %v793
      %v795 = vpop.f32.mrb[0].mxu0
      %v796 = vadd.f32 %v617, %v795
      %v797 = vpop.f32.mrb[0].mxu0
      %v798 = vadd.f32 %v622, %v797
      %v799 = vpop.f32.mrb[0].mxu0
      %v800 = vadd.f32 %v622, %v799
      %801 = vmatprep.mubr.bf16.mxu0 0
      %802 = vmatmul.mubr.bf16.gmra.mrb[0].mxu0 %v704
      %v803 = vpop.f32.mrb[0].mxu0
      %v804 = vadd.f32 %v627, %v803
      %v805 = vpop.f32.mrb[0].mxu0
      %v806 = vadd.f32 %v627, %v805
      %v807 = vpop.f32.mrb[0].mxu0
      %v808 = vadd.f32 %v632, %v807
      %v809 = vpop.f32.mrb[0].mxu0
      %v810 = vadd.f32 %v632, %v809
      %811 = vmatprep.mubr.bf16.mxu0 0
      %812 = vmatmul.mubr.bf16.gmra.mrb[0].mxu0 %v707
      %v813 = vpop.f32.mrb[0].mxu0
      %v814 = vadd.f32 %v637, %v813
      %v815 = vpop.f32.mrb[0].mxu0
      %v816 = vadd.f32 %v637, %v815
      %v817 = vpop.f32.mrb[0].mxu0
      %v818 = vadd.f32 %v642, %v817
      %v819 = vpop.f32.mrb[0].mxu0
      %v820 = vadd.f32 %v642, %v819
      %821 = vdwg.mxu0
      %v822 = vmul.f32 %v744, 0.2
      %v823 = vmul.f32 %v746, 0.2
      %v824 = vmul.f32 %v748, 0.2
      %v825 = vmul.f32 %v750, 0.2
      %v826 = vmul.f32 %v754, 0.2
      %v827 = vmul.f32 %v756, 0.2
      %v828 = vmul.f32 %v758, 0.2
      %v829 = vmul.f32 %v760, 0.2
      %v830 = vmul.f32 %v764, 0.2
      %v831 = vmul.f32 %v766, 0.2
      %v832 = vmul.f32 %v768, 0.2
      %v833 = vmul.f32 %v770, 0.2
      %v834 = vmul.f32 %v774, 0.2
      %v835 = vmul.f32 %v776, 0.2
      %v836 = vmul.f32 %v778, 0.2
      %v837 = vmul.f32 %v780, 0.2
      %v838 = vmul.f32 %v784, 0.2
      %v839 = vmul.f32 %v786, 0.2
      %v840 = vmul.f32 %v788, 0.2
      %v841 = vmul.f32 %v790, 0.2
      %v842 = vmul.f32 %v794, 0.2
      %v843 = vmul.f32 %v796, 0.2
      %v844 = vmul.f32 %v798, 0.2
      %v845 = vmul.f32 %v800, 0.2
      %v846 = vmul.f32 %v804, 0.2
      %v847 = vmul.f32 %v806, 0.2
      %v848 = vmul.f32 %v808, 0.2
      %v849 = vmul.f32 %v810, 0.2
      %v850 = vmul.f32 %v814, 0.2
      %v851 = vmul.f32 %v816, 0.2
      %v852 = vmul.f32 %v818, 0.2
      %v853 = vmul.f32 %v820, 0.2
      %v854 = vmax.f32 %v744, %v822
      %v855 = vmax.f32 %v746, %v823
      %v856 = vmax.f32 %v748, %v824
      %v857 = vmax.f32 %v750, %v825
      %v858 = vmax.f32 %v754, %v826
      %v859 = vmax.f32 %v756, %v827
      %v860 = vmax.f32 %v758, %v828
      %v861 = vmax.f32 %v760, %v829
      %v862 = vmax.f32 %v764, %v830
      %v863 = vmax.f32 %v766, %v831
      %v864 = vmax.f32 %v768, %v832
      %v865 = vmax.f32 %v770, %v833
      %v866 = vmax.f32 %v774, %v834
      %v867 = vmax.f32 %v776, %v835
      %v868 = vmax.f32 %v778, %v836
      %v869 = vmax.f32 %v780, %v837
      %v870 = vmax.f32 %v784, %v838
      %v871 = vmax.f32 %v786, %v839
      %v872 = vmax.f32 %v788, %v840
      %v873 = vmax.f32 %v790, %v841
      %v874 = vmax.f32 %v794, %v842
      %v875 = vmax.f32 %v796, %v843
      %v876 = vmax.f32 %v798, %v844
      %v877 = vmax.f32 %v800, %v845
      %v878 = vmax.f32 %v804, %v846
      %v879 = vmax.f32 %v806, %v847
      %v880 = vmax.f32 %v808, %v848
      %v881 = vmax.f32 %v810, %v849
      %v882 = vmax.f32 %v814, %v850
      %v883 = vmax.f32 %v816, %v851
      %v884 = vmax.f32 %v818, %v852
      %v885 = vmax.f32 %v820, %v853
      %v886 = vld [vmem:[%s5] sm:$0x1]
      %v887 = vpack.c.bf16 %v856, %v854
      %v888 = vpack.c.bf16 %v857, %v855
      %v889 = vpack.c.bf16 %v860, %v858
      %v890 = vpack.c.bf16 %v861, %v859
      %v891 = vpack.c.bf16 %v864, %v862
      %v892 = vpack.c.bf16 %v865, %v863
      %v893 = vpack.c.bf16 %v868, %v866
      %v894 = vpack.c.bf16 %v869, %v867
      %v895 = vpack.c.bf16 %v872, %v870
      %v896 = vpack.c.bf16 %v873, %v871
      %v897 = vpack.c.bf16 %v876, %v874
      %v898 = vpack.c.bf16 %v877, %v875
      %v899 = vpack.c.bf16 %v880, %v878
      %v900 = vpack.c.bf16 %v881, %v879
      %v901 = vpack.c.bf16 %v884, %v882
      %v902 = vpack.c.bf16 %v885, %v883
      %v903 = vld [vmem:[#allocation2] sm:$0x1]
      %905 = vset.pattern.permute.xlu0 0
      %906 = vperm.xlu0 %905, %v903
      %v907 = vpop.permute.xlu0 %906
      %v909 = vlaneseq
      %v910 = vshrl.u32 %v909, 7
      %v911 = vsub.s32 0, %v910
      %v912 = vrot.slane %v907, %v911
      %913 = vmatprep.subr.bf16.mxu0 %v888
      %914 = vmatpush1.bf16.msra.mxu0 %v887
      %915 = vmatprep.subr.bf16.mxu0 %v890
      %916 = vmatpush1.bf16.msra.mxu0 %v889
      %917 = vmatprep.subr.bf16.mxu0 %v892
      %918 = vmatpush1.bf16.msra.mxu0 %v891
      %919 = vmatprep.subr.bf16.mxu0 %v894
      %920 = vmatpush1.bf16.msra.mxu0 %v893
      %921 = vmatprep.subr.bf16.mxu0 %v896
      %922 = vmatpush1.bf16.msra.mxu0 %v895
      %923 = vmatprep.subr.bf16.mxu0 %v898
      %924 = vmatpush1.bf16.msra.mxu0 %v897
      %925 = vmatprep.subr.bf16.mxu0 %v900
      %926 = vmatpush1.bf16.msra.mxu0 %v899
      %927 = vmatprep.subr.bf16.mxu0 %v902
      %928 = vmatpush1.bf16.msra.mxu0 %v901
      %929 = vmatprep.subr.bf16.mxu0 0
      %930 = vmatpush1.bf16.msra.mxu0 0
      %931 = vmatprep.subr.bf16.mxu0 0
      %932 = vmatpush1.bf16.msra.mxu0 0
      %933 = vmatprep.subr.bf16.mxu0 0
      %934 = vmatpush1.bf16.msra.mxu0 0
      %935 = vmatprep.subr.bf16.mxu0 0
      %936 = vmatpush1.bf16.msra.mxu0 0
      %937 = vmatprep.subr.bf16.mxu0 0
      %938 = vmatpush1.bf16.msra.mxu0 0
      %939 = vmatprep.subr.bf16.mxu0 0
      %940 = vmatpush1.bf16.msra.mxu0 0
      %941 = vmatprep.subr.bf16.mxu0 0
      %942 = vmatpush1.bf16.msra.mxu0 0
      %943 = vmatprep.subr.bf16.mxu0 0
      %944 = vmatpush1.bf16.msra.mxu0 0
      %945 = vmatprep.mubr.bf16.mxu0 0
      %946 = vmatmul.mubr.bf16.gmra.mrb[0].mxu0 %v886
      %v947 = vpop.f32.mrb[0].mxu0
      %v948 = vadd.f32 %v912, %v947
      %v949 = vpop.f32.mrb[0].mxu0
      %v950 = vadd.f32 %v912, %v949
      %v951 = vpop.f32.mrb[0].mxu0
      %v952 = vpop.f32.mrb[0].mxu0
      %953 = vdwg.mxu0
      %v954 = vsub.f32 0.0, %v948
      %v955 = vsub.f32 0.0, %v950
      %v956 = vmul.f32 %v954, 1.442695
      %v957 = vpow.pop %v956
      %v958 = vmul.f32 %v955, 1.442695
      %v959 = vpow.pop %v958
      %v960 = vadd.f32 %v957, 1.0
      %v961 = vadd.f32 %v959, 1.0
      %v962 = vrcp.pop %v960
      %v963 = vmul.f32 1.0, %v962
      %v964 = vrcp.pop %v961
      %v965 = vmul.f32 1.0, %v964
      %v968 = vcombine.low %v963, %v965
      %v970 = vunpack.c.l.s4 1966171168
      %v971 = vunpack.c.0.s8 %v970
      %v972 = vlaneseq
      %v973 = vshrl.u32 %v972, 7
      %v974 = vsub.s32 %v971, %v973
      %v975 = vrot.slane %v968, %v974
      %v977 = vunpack.c.l.s4 1966171168
      %v978 = vunpack.c.0.s8 %v977
      %v979 = vlaneseq
      %v980 = vshrl.u32 %v979, 7
      %v981 = vsub.s32 %v978, %v980
      %v982 = vrot.slane %v975, %v981
      %v984 = vlaneseq
      %vm985 = vcmp.ge.s32.totalorder %v984, 0
      %vm986 = vcmp.lt.s32.totalorder %v984, 256
      %vm987 = vmand %vm985, %vm986
      %988 = vst.msk [vmem:[%s316] sm:$0x3] %vm987, %v982
      %s989 = smul.u32 2, %s25
      %p990 = scmp.lt.s32.totalorder %s24, 1
      %s991 = scalar_select %p990, %s24, 1
      %p992 = scmp.lt.s32.totalorder %s989, 1
      %s993 = scalar_select %p992, %s989, 1
      %s994 = smul.addr %s991, 2
      %s995 = sadd.s32 %s993, %s994
      %s996 = scalar_lea.vmem %s7, %s995
      // Predicated region
      $region49: #{discriminator_forward.1} parent=47 // pred_check
        %p997 = pneg %p206
      $region50: #{discriminator_forward.1} parent=47 // pred_check_branch
        %999 = sbr.rel (%p997) target = $region52
      $region51: #{discriminator_forward.1} parent=47 // pred_region
        %s1000 = smul.u32 2, %s25
      $region52: #{discriminator_forward.1} parent=47 // pred_fallthru
        _
    $region48: #{discriminator_forward.1} parent=5 // pred_fallthru
      _
    %p1001 = scmp.le.s32.totalorder 2, %s15
    // Predicated region
    $region53: #{discriminator_forward.1} parent=5 // pred_check
      %p1002 = pneg %p1001
    $region54: #{discriminator_forward.1} parent=5 // pred_check_branch
      %1004 = sbr.rel (%p1002) target = $region56
    $region55: #{discriminator_forward.1} parent=5 // pred_region
      %s1005 = ssub.s32 %s15, 2
      // Predicated region
      $region57: #{discriminator_forward.1} parent=55 // pred_check
        %p1006 = pneg %p212
      $region58: #{discriminator_forward.1} parent=55 // pred_check_branch
        %1008 = sbr.rel (%p1006) target = $region60
      $region59: #{discriminator_forward.1} parent=55 // pred_region
        %s1009 = smul.u32 2, %s27
        %p1010 = scmp.lt.s32.totalorder %s26, 1
        %s1011 = scalar_select %p1010, %s26, 1
        %p1012 = scmp.lt.s32.totalorder %s1009, 1
        %s1013 = scalar_select %p1012, %s1009, 1
        %s1014 = smul.addr %s1011, 2
        %s1015 = sadd.s32 %s1013, %s1014
        %s1016 = scalar_lea.vmem %s7, %s1015
      $region60: #{discriminator_forward.1} parent=55 // pred_fallthru
        _
    $region56: #{discriminator_forward.1} parent=5 // pred_fallthru
      _
  $region6: #{discriminator_forward.1} parent=0 // loop_footer
    %s19 = sadd.s32 1, %s15
  $region7: #{discriminator_forward.1} parent=0 // loop_footer_branch
    %14 = sbr.rel target = $region3
  $region8: #{discriminator_forward.1} parent=0 // loop_exit
    _

</llo_original>
